<compile_context>
chip_gen: v7x
topology: tpu7x:2x2x1
jax: 0.10.0
libtpu: 0.0.40
codegen_flags: <defaults>
</compile_context>

<pallas_src>
import functools

import jax
import jax.numpy as jnp
from jax.experimental import pallas as pl
from jax.experimental.pallas import tpu as pltpu


def _round_up(x, m):
    return ((x + m - 1) // m) * m


def _pick_tile(dim, align, cap):
    """Tile size (multiple of `align`, <= cap) minimizing total padded extent."""
    dim_a = _round_up(dim, align)
    if dim_a <= cap:
        return dim_a
    best_t, best_pad = align, None
    t = (cap // align) * align
    while t >= align:
        padded = _round_up(dim_a, t)
        if best_pad is None or padded < best_pad:
            best_pad, best_t = padded, t
        t -= align
    return best_t


def _linear_kernel_kloop(x_ref, w_ref, o_ref, acc_ref):
    """(tm, tn) output tile, K reduced across grid axis 2 into an f32 accumulator."""
    @pl.when(pl.program_id(2) == 0)
    def _init():
        acc_ref[...] = jnp.zeros_like(acc_ref)

    acc_ref[...] += jnp.dot(
        x_ref[...], w_ref[...], preferred_element_type=jnp.float32
    )

    @pl.when(pl.program_id(2) == pl.num_programs(2) - 1)
    def _finalize():
        o_ref[...] = acc_ref[...].astype(o_ref.dtype)


def _linear_kernel_single(x_ref, w_ref, o_ref):
    """K fits in one tile: no accumulator round-trip, write the tile directly."""
    o_ref[...] = jnp.dot(
        x_ref[...], w_ref[...], preferred_element_type=jnp.float32
    ).astype(o_ref.dtype)


@functools.partial(
    jax.jit, static_argnames=("compute_dtype", "tm_cap", "tk_cap", "tn_cap")
)
def linear_net_forward(
    x, weight, compute_dtype=jnp.float32, tm_cap=512, tk_cap=2048, tn_cap=1024
):
    """Forward pass of LinearNet: (X @ W.T).reshape(-1).

    Args:
      x:      [batch, input_dim] (or [input_dim], or [..., input_dim]) float32
      weight: [output_dim, input_dim] float32 (PyTorch nn.Linear layout)
      compute_dtype: dtype fed to the MXU. f32 (default, closest to the torch
        reference) or bf16 (fast path on bf16-native MXUs; accumulation stays f32).
      t*_cap: per-axis tile caps (sized so the double-buffered working set stays
        well under v7x's 64 MiB physical VMEM while filling v5e/v6e comfortably).

    Returns:
      [batch * output_dim] float32, matching `self.model(X).view(-1)`.
    """
    x = jnp.asarray(x, dtype=jnp.float32)
    weight = jnp.asarray(weight, dtype=jnp.float32)
    if x.ndim == 1:
        x = x[None, :]
    elif x.ndim > 2:
        x = x.reshape(-1, x.shape[-1])
    batch, input_dim = x.shape
    output_dim, w_in = weight.shape
    assert w_in == input_dim, "weight inner dim must match x feature dim"

    itemsize = jnp.dtype(compute_dtype).itemsize
    m_align = 16 if itemsize < 4 else 8  # bf16 packs 2 rows per sublane

    # --- tile / padding selection (minimize padded waste) -------------------
    tm = _pick_tile(batch, m_align, tm_cap)
    m_pad = _round_up(batch, tm)

    if input_dim < 128:
        tk, k_pad = input_dim, input_dim          # full-dim block, no pad needed
    else:
        tk = _pick_tile(input_dim, 128, tk_cap)
        k_pad = _round_up(_round_up(input_dim, 128), tk)

    if output_dim < 128:
        tn, n_pad = output_dim, output_dim        # full-dim block, no pad needed
    else:
        tn = _pick_tile(output_dim, 128, tn_cap)
        n_pad = _round_up(_round_up(output_dim, 128), tn)

    m_tiles = m_pad // tm
    n_tiles = n_pad // tn
    k_tiles = k_pad // tk

    # v7x megacore: K is 'arbitrary' and cannot be core-split, so make sure the
    # parallel axes expose >=2 programs when it is cheap to do so.
    if m_tiles * n_tiles == 1:
        if tn % 256 == 0:
            tn //= 2
            n_tiles = n_pad // tn
        elif tm >= 2 * m_align and tm % (2 * m_align) == 0:
            tm //= 2
            m_tiles = m_pad // tm

    # --- operand prep --------------------------------------------------------
    # K padding is REQUIRED (zeros contribute nothing to the reduction);
    # M/N padding is only for tile divisibility and is sliced off below.
    pm, pk, pn = m_pad - batch, k_pad - input_dim, n_pad - output_dim
    x_p = jnp.pad(x, ((0, pm), (0, pk))) if (pm or pk) else x
    x_p = x_p.astype(compute_dtype)

    # One-time weight transpose to [K, N] -> plain (M,K)@(K,N) dot in-kernel
    # (no per-step XLU transpose of the weight tile).
    # TODO(synk): in a real serving path, hoist/cache this prepped weight across calls.
    w_t = weight.T
    w_t = jnp.pad(w_t, ((0, pk), (0, pn))) if (pk or pn) else w_t
    w_t = w_t.astype(compute_dtype)

    # --- VMEM budget (double-buffered inputs/output + f32 accumulator) ------
    vmem_bytes = (
        2 * tm * tk * itemsize
        + 2 * tk * tn * itemsize
        + 2 * tm * tn * 4
        + (tm * tn * 4 if k_tiles > 1 else 0)
    )
    # <=48 MiB keeps us inside v7x's 64 MiB physical VMEM with headroom.
    vmem_limit = int(min(max(vmem_bytes + (8 << 20), 32 << 20), 48 << 20))

    # Put the axis with more tiles first so megacore sharding has work on it.
    n_first = n_tiles > m_tiles

    if k_tiles > 1:
        if n_first:
            grid = (n_tiles, m_tiles, k_tiles)
            x_map = lambda j, i, k: (i, k)
            w_map = lambda j, i, k: (k, j)
            o_map = lambda j, i, k: (i, j)
        else:
            grid = (m_tiles, n_tiles, k_tiles)
            x_map = lambda i, j, k: (i, k)
            w_map = lambda i, j, k: (k, j)
            o_map = lambda i, j, k: (i, j)
        kernel = _linear_kernel_kloop
        scratch = [pltpu.VMEM((tm, tn), jnp.float32)]
        semantics = ("parallel", "parallel", "arbitrary")
    else:
        if n_first:
            grid = (n_tiles, m_tiles)
            x_map = lambda j, i: (i, 0)
            w_map = lambda j, i: (0, j)
            o_map = lambda j, i: (i, j)
        else:
            grid = (m_tiles, n_tiles)
            x_map = lambda i, j: (i, 0)
            w_map = lambda i, j: (0, j)
            o_map = lambda i, j: (i, j)
        kernel = _linear_kernel_single
        scratch = []
        semantics = ("parallel", "parallel")

    y_p = pl.pallas_call(
        kernel,
        out_shape=jax.ShapeDtypeStruct((m_pad, n_pad), jnp.float32),
        grid_spec=pltpu.PrefetchScalarGridSpec(
            num_scalar_prefetch=0,
            grid=grid,
            in_specs=[
                pl.BlockSpec((tm, tk), x_map),   # X tile
                pl.BlockSpec((tk, tn), w_map),   # W tile (pre-transposed [K, N])
                # If the weight DMA is still exposed for a given shape, deepen its
                # pipeline with pipeline_mode=pl.Buffered(3) on the W spec.
            ],
            out_specs=pl.BlockSpec((tm, tn), o_map),
            scratch_shapes=scratch,
        ),
        compiler_params=pltpu.CompilerParams(
            dimension_semantics=semantics,
            vmem_limit_bytes=vmem_limit,
        ),
    )(x_p, w_t)

    return y_p[:batch, :output_dim].reshape(-1)


def init_linear_weight(key, input_dim, output_dim):
    # Mimic PyTorch's default uniform(-1/sqrt(in), 1/sqrt(in)) init.
    bound = 1.0 / jnp.sqrt(jnp.float32(input_dim))
    return jax.random.uniform(
        key, (output_dim, input_dim), dtype=jnp.float32, minval=-bound, maxval=bound
    )


if __name__ == "__main__":
    import numpy as np

    key = jax.random.PRNGKey(0)
    k_x, k_w, k_x2, k_w2 = jax.random.split(key, 4)

    def ref_forward(x, w):
        # High-precision host reference (independent of TPU matmul precision).
        return (
            np.asarray(x, np.float64) @ np.asarray(w, np.float64).T
        ).reshape(-1)

    # Case 1: small shapes consistent with the module (single-program fast path).
    batch, input_dim, output_dim = 8, 32, 16
    x = jax.random.normal(k_x, (batch, input_dim), dtype=jnp.float32)
    weight = init_linear_weight(k_w, input_dim, output_dim)

    out = linear_net_forward(x, weight)
    jax.block_until_ready(out)
    ref = ref_forward(x, weight)
    assert out.shape == (batch * output_dim,)
    assert jnp.allclose(out, ref, atol=1e-2, rtol=1e-2), "f32 small case mismatch"

    # Case 2: non-tile-multiple shapes (edge padding + N-split parallel grid).
    b2, in2, out2 = 260, 200, 130
    x2 = jax.random.normal(k_x2, (b2, in2), dtype=jnp.float32)
    w2 = init_linear_weight(k_w2, in2, out2)
    y2 = linear_net_forward(x2, w2)
    jax.block_until_ready(y2)
    ref2 = ref_forward(x2, w2)
    assert y2.shape == (b2 * out2,)
    assert jnp.allclose(y2, ref2, atol=1e-2, rtol=1e-2), "f32 padded case mismatch"

    # Case 3: small tile caps to exercise the K-loop accumulator (3-D grid) path.
    y3 = linear_net_forward(x2, w2, tm_cap=128, tk_cap=128, tn_cap=128)
    jax.block_until_ready(y3)
    assert jnp.allclose(y3, ref2, atol=1e-2, rtol=1e-2), "K-loop grid path mismatch"

    # Case 4: bf16 fast path (f32 accumulation), looser tolerance.
    y4 = linear_net_forward(x, weight, compute_dtype=jnp.bfloat16)
    jax.block_until_ready(y4)
    assert jnp.allclose(y4, ref, atol=3e-2, rtol=3e-2), "bf16 path mismatch"

    print("KERNEL_OK")
</pallas_src>

<mosaic_0001>
module attributes {stable_mosaic.version = 11 : i64} {
  func.func @_linear_kernel_single(%arg0: i32, %arg1: i32, %arg2: memref<8x32xf32, #tpu.memory_space<vmem>>, %arg3: memref<32x16xf32, #tpu.memory_space<vmem>>, %arg4: memref<8x16xf32, #tpu.memory_space<vmem>>) attributes {dimension_semantics = [#tpu.dimension_semantics<parallel>, #tpu.dimension_semantics<parallel>], iteration_bounds = array<i64: 1, 1>, scalar_prefetch = 0 : i64, scratch_operands = 0 : i64, tpu.core_type = #tpu.core_type<tc>, window_params = [{transform_indices = @transform_0, window_bounds = array<i64: 8, 32>}, {transform_indices = @transform_1, window_bounds = array<i64: 32, 16>}, {transform_indices = @transform_2, window_bounds = array<i64: 8, 16>}]} {
    %c0 = arith.constant 0 : index
    %c0_0 = arith.constant 0 : index
    %0 = vector.load %arg2[%c0, %c0_0] : memref<8x32xf32, #tpu.memory_space<vmem>>, vector<8x32xf32>
    %c0_1 = arith.constant 0 : index
    %c0_2 = arith.constant 0 : index
    %1 = vector.load %arg3[%c0_1, %c0_2] : memref<32x16xf32, #tpu.memory_space<vmem>>, vector<32x16xf32>
    %cst = arith.constant dense<0.000000e+00> : vector<8x16xf32>
    %2 = tpu.matmul %0, %1, %cst {dimension_numbers = #tpu.dot_dimension_numbers<[1], [0], [0], [1], [0, 0, 1, 1], [], []>} : vector<8x32xf32>, vector<32x16xf32>, vector<8x16xf32> -> vector<8x16xf32>
    %c0_3 = arith.constant 0 : index
    %c0_4 = arith.constant 0 : index
    %3 = vector.load %arg4[%c0_3, %c0_4] : memref<8x16xf32, #tpu.memory_space<vmem>>, vector<8x16xf32>
    tpu.vector_store %arg4[%c0_3, %c0_4], %2 {strides = array<i32>} : memref<8x16xf32, #tpu.memory_space<vmem>>, vector<8x16xf32>,
    return
  }
  func.func @transform_0(%arg0: i32, %arg1: i32) -> (i32, i32) {
    %c0_i32 = arith.constant 0 : i32
    %c0_i32_0 = arith.constant 0 : i32
    return %arg0, %c0_i32 : i32, i32
  }
  func.func @transform_1(%arg0: i32, %arg1: i32) -> (i32, i32) {
    %c0_i32 = arith.constant 0 : i32
    %c0_i32_0 = arith.constant 0 : i32
    return %c0_i32, %arg1 : i32, i32
  }
  func.func @transform_2(%arg0: i32, %arg1: i32) -> (i32, i32) {
    %c0_i32 = arith.constant 0 : i32
    return %arg0, %arg1 : i32, i32
  }
}

</mosaic_0001>

<llo_original>
// kernel: linear_net_forward.1
$region0: #{linear_net_forward.1}
  #allocation0 [shape = 'u32[]', space=smem, size = 0x4, offset = 0x4, fixed_abs, tag = 'smem constant byte address 0x4 - core index']
  #allocation1 [shape = 'u32[144,128]{1,0:T(1,128)}', space=vmem, size = 0x12000, scoped, tag = 'internal scratch']
  %s0 = inlined_call_operand.vmem [shape: f32[8,32], index: 0, kind: input, shape index: {}]
  %s1 = inlined_call_operand.vmem [shape: f32[32,16], index: 1, kind: input, shape index: {}]
  %s2 = inlined_call_operand.vmem [shape: f32[8,16], index: 2, kind: output, shape index: {}]
  %s3 = sld [smem:[#allocation0]]
  $region18: #{linear_net_forward.1} parent=0
    _
  %s5 = ssub.s32 1, %s3
  %s6 = scalar_select 0, %s5, %s3
  // Predicated region
  $region2: #{linear_net_forward.1} parent=0 // pred_check
    _
  $region3: #{linear_net_forward.1} parent=0 // pred_check_branch
    %8 = sbr.rel (0) target = $region5
  $region4: #{linear_net_forward.1} parent=0 // pred_region
    _
  $region5: #{linear_net_forward.1} parent=0 // pred_fallthru
    _
  // Predicated region
  $region6: #{linear_net_forward.1} parent=0 // pred_check
    _
  $region7: #{linear_net_forward.1} parent=0 // pred_check_branch
    %10 = sbr.rel (0) target = $region9
  $region8: #{linear_net_forward.1} parent=0 // pred_region
    _
  $region9: #{linear_net_forward.1} parent=0 // pred_fallthru
    _
  %v11 = vld [vmem:[%s0] sm:$0xff]
  %v12 = vld [vmem:[%s1] sm:$0xff]
  %v13 = vld [vmem:[%s1 + $0x8] sm:$0xff]
  %v14 = vld [vmem:[%s1 + $0x10] sm:$0xff]
  %v15 = vld [vmem:[%s1 + $0x18] sm:$0xff]
  %vm16 = vcmask 261120
  %v18 = vsel %vm16, %v11, 0
  %20 = vmatprep.subr.mxu0 0.0
  %21 = vmatpush1.msra.mxu0 %v12
  %22 = vmatprep.subr.mxu0 0.0
  %23 = vmatpush1.msra.mxu0 %v13
  %24 = vmatprep.subr.mxu0 0.0
  %25 = vmatpush1.msra.mxu0 %v14
  %26 = vmatprep.subr.mxu0 0.0
  %27 = vmatpush1.msra.mxu0 %v15
  %28 = vmatprep.subr.mxu0 0.0
  %29 = vmatpush1.msra.mxu0 0.0
  %30 = vmatprep.subr.mxu0 0.0
  %31 = vmatpush1.msra.mxu0 0.0
  %32 = vmatprep.subr.mxu0 0.0
  %33 = vmatpush1.msra.mxu0 0.0
  %34 = vmatprep.subr.mxu0 0.0
  %35 = vmatpush1.msra.mxu0 0.0
  %36 = vmatprep.subr.mxu0 0.0
  %37 = vmatpush1.msra.mxu0 0.0
  %38 = vmatprep.subr.mxu0 0.0
  %39 = vmatpush1.msra.mxu0 0.0
  %40 = vmatprep.subr.mxu0 0.0
  %41 = vmatpush1.msra.mxu0 0.0
  %42 = vmatprep.subr.mxu0 0.0
  %43 = vmatpush1.msra.mxu0 0.0
  %44 = vmatprep.subr.mxu0 0.0
  %45 = vmatpush1.msra.mxu0 0.0
  %46 = vmatprep.subr.mxu0 0.0
  %47 = vmatpush1.msra.mxu0 0.0
  %48 = vmatprep.subr.mxu0 0.0
  %49 = vmatpush1.msra.mxu0 0.0
  %50 = vmatprep.subr.mxu0 0.0
  %51 = vmatpush1.msra.mxu0 0.0
  %52 = vmatprep.subr.mxu0 0.0
  %53 = vmatpush1.msra.mxu0 0.0
  %54 = vmatprep.subr.mxu0 0.0
  %55 = vmatpush1.msra.mxu0 0.0
  %56 = vmatprep.subr.mxu0 0.0
  %57 = vmatpush1.msra.mxu0 0.0
  %58 = vmatprep.subr.mxu0 0.0
  %59 = vmatpush1.msra.mxu0 0.0
  %60 = vmatprep.subr.mxu0 0.0
  %61 = vmatpush1.msra.mxu0 0.0
  %62 = vmatprep.subr.mxu0 0.0
  %63 = vmatpush1.msra.mxu0 0.0
  %64 = vmatprep.subr.mxu0 0.0
  %65 = vmatpush1.msra.mxu0 0.0
  %66 = vmatprep.subr.mxu0 0.0
  %67 = vmatpush1.msra.mxu0 0.0
  %68 = vmatprep.subr.mxu0 0.0
  %69 = vmatpush1.msra.mxu0 0.0
  %70 = vmatprep.subr.mxu0 0.0
  %71 = vmatpush1.msra.mxu0 0.0
  %72 = vmatprep.subr.mxu0 0.0
  %73 = vmatpush1.msra.mxu0 0.0
  %74 = vmatprep.subr.mxu0 0.0
  %75 = vmatpush1.msra.mxu0 0.0
  %76 = vmatprep.subr.mxu0 0.0
  %77 = vmatpush1.msra.mxu0 0.0
  %78 = vmatprep.subr.mxu0 0.0
  %79 = vmatpush1.msra.mxu0 0.0
  %80 = vmatprep.subr.mxu0 0.0
  %81 = vmatpush1.msra.mxu0 0.0
  %82 = vmatprep.subr.mxu0 0.0
  %83 = vmatpush1.msra.mxu0 0.0
  %84 = vmatprep.mubr.f32.mxu0 0.0
  %85 = vmatmul.mubr.f32.gmra.mrb[0].mxu0 %v18
  %v86 = vpop.f32.mrb[0].mxu0
  %v87 = vadd.f32 0.0, %v86
  %v88 = vpop.f32.mrb[0].mxu0
  %89 = vdwg.mxu0
  %vm90 = vcmask 130048
  %91 = vst.msk [vmem:[%s2] sm:$0xff] %vm90, %v87
  // Predicated region
  $region10: #{linear_net_forward.1} parent=0 // pred_check
    _
  $region11: #{linear_net_forward.1} parent=0 // pred_check_branch
    %93 = sbr.rel (0) target = $region13
  $region12: #{linear_net_forward.1} parent=0 // pred_region
    _
  $region13: #{linear_net_forward.1} parent=0 // pred_fallthru
    _
  // Predicated region
  $region14: #{linear_net_forward.1} parent=0 // pred_check
    _
  $region15: #{linear_net_forward.1} parent=0 // pred_check_branch
    %95 = sbr.rel (0) target = $region17
  $region16: #{linear_net_forward.1} parent=0 // pred_region
    _
  $region17: #{linear_net_forward.1} parent=0 // pred_fallthru
    _

</llo_original>
